<compile_context>
chip_gen: v6e
topology: v6e:2x2x1
jax: 0.10.0
libtpu: 0.0.40
codegen_flags: <defaults>
</compile_context>

<pallas_src>
import functools

import jax
import jax.numpy as jnp
from jax.experimental import pallas as pl
from jax.experimental.pallas import tpu as pltpu


_VMEM_LIMIT_BYTES = 32 * 1024 * 1024      # safe on v5e/v6e (128 MiB) and v7x (64 MiB)
_DEFAULT_LANE_BUDGET = 4 * 1024 * 1024    # target bytes per (C, TL) x-block
_FUSED_MAX_BYTES = 4 * 1024 * 1024        # activation size cap for the fused path
_FUSED_MAX_BATCH = 32                     # static-unroll cap for the fused path


# ----------------------------------------------------------------------------
# Kernels
# ----------------------------------------------------------------------------
def _fused_kernel(gamma_ref, beta_ref, rmean_ref, x_ref, y_ref, mean_ref,
                  var_ref, *, eps, count, batch):
    """Whole activation resident in VMEM: stats + normalize in one pass."""
    rm = rmean_ref[...]                                   # (C, 1) shift value
    s = jnp.zeros_like(rm)
    ss = jnp.zeros_like(rm)
    for n in range(batch):                                # small static unroll
        xn = x_ref[n].astype(jnp.float32) - rm            # (C, HW)
        s = s + jnp.sum(xn, axis=-1, keepdims=True)
        ss = ss + jnp.sum(xn * xn, axis=-1, keepdims=True)
    inv_count = 1.0 / count
    mean_s = s * inv_count                                # mean of shifted x
    var = jnp.maximum(ss * inv_count - mean_s * mean_s, 0.0)
    mean = rm + mean_s
    scale = gamma_ref[...] * jax.lax.rsqrt(var + eps)
    shift = beta_ref[...] - mean * scale
    for n in range(batch):
        y_ref[n] = (x_ref[n].astype(jnp.float32) * scale + shift
                    ).astype(y_ref.dtype)
    mean_ref[...] = mean
    var_ref[...] = var


def _stats_kernel(rmean_ref, x_ref, part_ref, sum_ref, sumsq_ref,
                  *, hw, tl, needs_mask):
    """Pass 1: per-(batch-row, channel) partial sums of (x - rm) and (x - rm)^2.

    Accumulates into lane-wide (C, 128) f32 scratch with VALU adds only; the
    single cross-lane reduce happens once per batch row in the finalize branch.
    Init/finalize depend only on the lane-tile index, so the N grid axis can be
    "parallel" (per-core scratch) without breaking the reduction.
    """
    l = pl.program_id(1)

    @pl.when(l == 0)
    def _init():
        sum_ref[...] = jnp.zeros_like(sum_ref)
        sumsq_ref[...] = jnp.zeros_like(sumsq_ref)

    x = x_ref[0].astype(jnp.float32) - rmean_ref[...]     # (C, TL), shifted
    if needs_mask:
        lane = jax.lax.broadcasted_iota(jnp.int32, x.shape, 1) + l * tl
        x = jnp.where(lane < hw, x, 0.0)                  # zero the padded tail

    nslice = tl // 128
    s = x[:, 0:128]
    ss = s * s
    for j in range(1, nslice):                            # static, <= 64 slices
        xs = x[:, j * 128:(j + 1) * 128]
        s = s + xs
        ss = ss + xs * xs
    sum_ref[...] += s
    sumsq_ref[...] += ss

    @pl.when(l == pl.num_programs(1) - 1)
    def _finalize():
        part_ref[0, 0] = jnp.sum(sum_ref[...], axis=-1, keepdims=True)
        part_ref[0, 1] = jnp.sum(sumsq_ref[...], axis=-1, keepdims=True)


def _normalize_kernel(scale_ref, shift_ref, x_ref, o_ref):
    """Pass 2: y = x * scale + shift (per-channel affine), fully parallel."""
    x = x_ref[0].astype(jnp.float32)                      # (C, TL)
    o_ref[0] = (x * scale_ref[...] + shift_ref[...]).astype(o_ref.dtype)


# ----------------------------------------------------------------------------
# Tiling helper
# ----------------------------------------------------------------------------
def _pick_lane_tile(hw, c, itemsize, budget_bytes, max_lanes=64):
    """Largest balanced multiple-of-128 lane tile fitting the VMEM budget."""
    hw_lanes = -(-hw // 128)                              # spatial in 128-lane groups
    cap = max(1, budget_bytes // (c * itemsize * 128))
    tl_lanes_max = max(1, min(hw_lanes, cap, max_lanes))
    k = -(-hw_lanes // tl_lanes_max)                      # number of lane blocks
    tl_lanes = -(-hw_lanes // k)                          # balanced block width
    return tl_lanes * 128


# ----------------------------------------------------------------------------
# Pallas-call wrappers
# ----------------------------------------------------------------------------
def _fused_bn(x, gamma, beta, rmean, eps, count):
    N, C, HW = x.shape
    full_spec = pl.BlockSpec((N, C, HW), lambda i: (0, 0, 0))
    cparam = pl.BlockSpec((C, 1), lambda i: (0, 0))
    y, mean, var = pl.pallas_call(
        functools.partial(_fused_kernel, eps=eps, count=count, batch=N),
        out_shape=(jax.ShapeDtypeStruct((N, C, HW), x.dtype),
                   jax.ShapeDtypeStruct((C, 1), jnp.float32),
                   jax.ShapeDtypeStruct((C, 1), jnp.float32)),
        grid_spec=pltpu.PrefetchScalarGridSpec(
            num_scalar_prefetch=0,
            grid=(1,),
            in_specs=[cparam, cparam, cparam, full_spec],
            out_specs=[full_spec, cparam, cparam]),
        compiler_params=pltpu.CompilerParams(
            dimension_semantics=("arbitrary",),
            vmem_limit_bytes=_VMEM_LIMIT_BYTES),
    )(gamma.reshape(C, 1), beta.reshape(C, 1), rmean.reshape(C, 1), x)
    return y, mean[:, 0], var[:, 0]


def _two_pass_bn(x, gamma, beta, rmean, eps, count, lane_budget):
    N, C, HW = x.shape
    tl = _pick_lane_tile(HW, C, x.dtype.itemsize, lane_budget)
    num_l = -(-HW // tl)
    needs_mask = (HW % tl) != 0

    x_spec = pl.BlockSpec((1, C, tl), lambda n, l: (n, 0, l))
    cparam = pl.BlockSpec((C, 1), lambda n, l: (0, 0))
    part_spec = pl.BlockSpec((1, 2, C, 1), lambda n, l: (n, 0, 0, 0))

    # ---- Pass 1: per-batch-row partial sums (N axis parallel for 2-TC chips)
    parts = pl.pallas_call(
        functools.partial(_stats_kernel, hw=HW, tl=tl, needs_mask=needs_mask),
        out_shape=jax.ShapeDtypeStruct((N, 2, C, 1), jnp.float32),
        grid_spec=pltpu.PrefetchScalarGridSpec(
            num_scalar_prefetch=0,
            grid=(N, num_l),
            in_specs=[cparam, x_spec],
            out_specs=part_spec,
            scratch_shapes=[pltpu.VMEM((C, 128), jnp.float32),
                            pltpu.VMEM((C, 128), jnp.float32)]),
        compiler_params=pltpu.CompilerParams(
            dimension_semantics=("parallel", "arbitrary"),
            vmem_limit_bytes=_VMEM_LIMIT_BYTES),
    )(rmean.reshape(C, 1), x)

    # ---- O(C) finalize in plain JAX (mean / var / scale / shift)
    tot = jnp.sum(parts, axis=0)[:, :, 0]                 # (2, C)
    inv_count = 1.0 / count
    mean_s = tot[0] * inv_count
    var = jnp.maximum(tot[1] * inv_count - mean_s * mean_s, 0.0)
    mean = rmean + mean_s
    scale = gamma * jax.lax.rsqrt(var + eps)
    shift = beta - mean * scale

    # ---- Pass 2: normalize + affine, independent lane-dense tiles
    y = pl.pallas_call(
        _normalize_kernel,
        out_shape=jax.ShapeDtypeStruct((N, C, HW), x.dtype),
        grid_spec=pltpu.PrefetchScalarGridSpec(
            num_scalar_prefetch=0,
            grid=(N, num_l),
            in_specs=[cparam, cparam, x_spec],
            out_specs=x_spec),
        compiler_params=pltpu.CompilerParams(
            dimension_semantics=("parallel", "parallel"),
            vmem_limit_bytes=_VMEM_LIMIT_BYTES),
    )(scale.reshape(C, 1), shift.reshape(C, 1), x)

    return y, mean, var


def domain_specific_batchnorm(x_nchw, gammas, betas, domain_id,
                              running_means=None, running_vars=None,
                              eps=1e-5, momentum=0.1,
                              force_two_pass=False,
                              lane_tile_budget=_DEFAULT_LANE_BUDGET):
    """Training-mode domain-specific BatchNorm2d.

    x_nchw: (N, C, H, W); gammas/betas/running_*: (num_domains, C).
    Returns (y, new_running_mean, new_running_var) for the selected domain.
    """
    assert x_nchw.ndim == 4, "expected 4D input (got {}D input)".format(x_nchw.ndim)
    N, C, H, W = x_nchw.shape
    HW = H * W
    count = float(N * HW)

    gamma = jnp.asarray(gammas)[domain_id].astype(jnp.float32)       # (C,)
    beta = jnp.asarray(betas)[domain_id].astype(jnp.float32)
    if running_means is None:
        rmean = jnp.zeros((C,), jnp.float32)
        rvar = jnp.ones((C,), jnp.float32)
    else:
        rmean = jnp.asarray(running_means)[domain_id].astype(jnp.float32)
        rvar = jnp.asarray(running_vars)[domain_id].astype(jnp.float32)

    # NCHW -> (N, C, H*W): pure reshape, no transpose, no extra HBM traffic.
    x = x_nchw.reshape(N, C, HW)
    x_bytes = x.size * x.dtype.itemsize

    use_fused = ((not force_two_pass)
                 and x_bytes <= _FUSED_MAX_BYTES
                 and N <= _FUSED_MAX_BATCH)
    if use_fused:
        y, mean, var = _fused_bn(x, gamma, beta, rmean, eps, count)
    else:
        y, mean, var = _two_pass_bn(x, gamma, beta, rmean, eps, count,
                                    lane_tile_budget)

    # PyTorch: biased var for normalization, unbiased var for running stats.
    unbiased = var * (count / max(count - 1.0, 1.0))
    new_rmean = (1.0 - momentum) * rmean + momentum * mean
    new_rvar = (1.0 - momentum) * rvar + momentum * unbiased
    return y.reshape(N, C, H, W), new_rmean, new_rvar


# ----------------------------------------------------------------------------
# Self-test
# ----------------------------------------------------------------------------
def _reference(x, gamma, beta, rm, rv, eps, momentum):
    N, C, H, W = x.shape
    mean = jnp.mean(x.astype(jnp.float32), axis=(0, 2, 3))
    var = jnp.mean((x.astype(jnp.float32) - mean.reshape(1, C, 1, 1)) ** 2,
                   axis=(0, 2, 3))
    y = ((x - mean.reshape(1, C, 1, 1))
         / jnp.sqrt(var.reshape(1, C, 1, 1) + eps)) \
        * gamma.reshape(1, C, 1, 1) + beta.reshape(1, C, 1, 1)
    cnt = N * H * W
    rm_new = (1.0 - momentum) * rm + momentum * mean
    rv_new = (1.0 - momentum) * rv + momentum * var * (cnt / (cnt - 1.0))
    return y.astype(x.dtype), rm_new, rv_new


def _check(x, gammas, betas, rms, rvs, domain_id, eps, momentum, **kw):
    y, nrm, nrv = domain_specific_batchnorm(
        x, gammas, betas, domain_id, rms, rvs, eps=eps, momentum=momentum, **kw)
    y = jax.block_until_ready(y)
    y_ref, rm_ref, rv_ref = _reference(
        x, gammas[domain_id], betas[domain_id], rms[domain_id], rvs[domain_id],
        eps, momentum)
    assert jnp.allclose(y, y_ref, atol=1e-4, rtol=1e-4)
    assert jnp.allclose(nrm, rm_ref, atol=1e-5, rtol=1e-5)
    assert jnp.allclose(nrv, rv_ref, atol=1e-5, rtol=1e-5)


if __name__ == "__main__":
    key = jax.random.PRNGKey(0)
    eps, momentum, num_domains, domain_id = 1e-5, 0.1, 3, 1

    # Case 1: fused single-call path (whole activation resident in VMEM).
    N, C, H, W = 2, 4, 16, 16
    k = jax.random.split(key, 5)
    x = jax.random.normal(k[0], (N, C, H, W), dtype=jnp.float32) * 2.0 + 0.5
    gammas = 1.0 + 0.1 * jax.random.normal(k[1], (num_domains, C), jnp.float32)
    betas = 0.1 * jax.random.normal(k[2], (num_domains, C), jnp.float32)
    rms = 0.1 * jax.random.normal(k[3], (num_domains, C), jnp.float32)
    rvs = 1.0 + 0.1 * jax.random.uniform(k[4], (num_domains, C), jnp.float32)
    _check(x, gammas, betas, rms, rvs, domain_id, eps, momentum)

    # Case 2: two-pass fallback, tiny lane budget to force multiple lane tiles.
    _check(x, gammas, betas, rms, rvs, domain_id, eps, momentum,
           force_two_pass=True, lane_tile_budget=1024)

    # Case 3: two-pass fallback with ragged spatial extent (7x7 -> lane mask).
    N2, C2, H2, W2 = 2, 8, 7, 7
    k2 = jax.random.split(jax.random.PRNGKey(1), 5)
    x2 = jax.random.normal(k2[0], (N2, C2, H2, W2), dtype=jnp.float32) - 0.3
    gammas2 = 1.0 + 0.1 * jax.random.normal(k2[1], (num_domains, C2), jnp.float32)
    betas2 = 0.1 * jax.random.normal(k2[2], (num_domains, C2), jnp.float32)
    rms2 = 0.1 * jax.random.normal(k2[3], (num_domains, C2), jnp.float32)
    rvs2 = 1.0 + 0.1 * jax.random.uniform(k2[4], (num_domains, C2), jnp.float32)
    _check(x2, gammas2, betas2, rms2, rvs2, domain_id, eps, momentum,
           force_two_pass=True)

    print("KERNEL_OK")
</pallas_src>

<mosaic_0001>
module attributes {stable_mosaic.version = 11 : i64} {
  func.func @_fused_kernel(%arg0: i32, %arg1: memref<4x1xf32, #tpu.memory_space<vmem>>, %arg2: memref<4x1xf32, #tpu.memory_space<vmem>>, %arg3: memref<4x1xf32, #tpu.memory_space<vmem>>, %arg4: memref<2x4x256xf32, #tpu.memory_space<vmem>>, %arg5: memref<2x4x256xf32, #tpu.memory_space<vmem>>, %arg6: memref<4x1xf32, #tpu.memory_space<vmem>>, %arg7: memref<4x1xf32, #tpu.memory_space<vmem>>) attributes {dimension_semantics = [#tpu.dimension_semantics<arbitrary>], iteration_bounds = array<i64: 1>, scalar_prefetch = 0 : i64, scratch_operands = 0 : i64, tpu.core_type = #tpu.core_type<tc>, window_params = [{pipeline_mode = #tpu.pipeline_mode<synchronous>, transform_indices = @transform_0, window_bounds = array<i64: 4, 1>}, {pipeline_mode = #tpu.pipeline_mode<synchronous>, transform_indices = @transform_1, window_bounds = array<i64: 4, 1>}, {pipeline_mode = #tpu.pipeline_mode<synchronous>, transform_indices = @transform_2, window_bounds = array<i64: 4, 1>}, {pipeline_mode = #tpu.pipeline_mode<synchronous>, transform_indices = @transform_3, window_bounds = array<i64: 2, 4, 256>}, {pipeline_mode = #tpu.pipeline_mode<synchronous>, transform_indices = @transform_4, window_bounds = array<i64: 2, 4, 256>}, {pipeline_mode = #tpu.pipeline_mode<synchronous>, transform_indices = @transform_5, window_bounds = array<i64: 4, 1>}, {pipeline_mode = #tpu.pipeline_mode<synchronous>, transform_indices = @transform_6, window_bounds = array<i64: 4, 1>}]} {
    %c0 = arith.constant 0 : index
    %c0_0 = arith.constant 0 : index
    %0 = vector.load %arg3[%c0, %c0_0] : memref<4x1xf32, #tpu.memory_space<vmem>>, vector<4x1xf32>
    %cst = arith.constant 0.000000e+00 : f32
    %1 = vector.broadcast %cst : f32 to vector<4x1xf32>
    %cst_1 = arith.constant 0.000000e+00 : f32
    %2 = vector.broadcast %cst_1 : f32 to vector<4x1xf32>
    %c0_2 = arith.constant 0 : index
    %c0_3 = arith.constant 0 : index
    %c0_4 = arith.constant 0 : index
    %3 = vector.load %arg4[%c0_2, %c0_3, %c0_4] : memref<2x4x256xf32, #tpu.memory_space<vmem>>, vector<1x4x256xf32>
    %4 = vector.shape_cast %3 : vector<1x4x256xf32> to vector<4x256xf32>
    %5 = vector.broadcast %0 : vector<4x1xf32> to vector<4x256xf32>
    %6 = arith.subf %4, %5 : vector<4x256xf32>
    %cst_5 = arith.constant dense<0.000000e+00> : vector<4xf32>
    %7 = vector.multi_reduction <add>, %6, %cst_5 [1] : vector<4x256xf32> to vector<4xf32>
    %8 = vector.shape_cast %7 : vector<4xf32> to vector<4x1xf32>
    %9 = arith.addf %1, %8 : vector<4x1xf32>
    %10 = arith.mulf %6, %6 : vector<4x256xf32>
    %cst_6 = arith.constant dense<0.000000e+00> : vector<4xf32>
    %11 = vector.multi_reduction <add>, %10, %cst_6 [1] : vector<4x256xf32> to vector<4xf32>
    %12 = vector.shape_cast %11 : vector<4xf32> to vector<4x1xf32>
    %13 = arith.addf %2, %12 : vector<4x1xf32>
    %c1 = arith.constant 1 : index
    %c0_7 = arith.constant 0 : index
    %c0_8 = arith.constant 0 : index
    %14 = vector.load %arg4[%c1, %c0_7, %c0_8] : memref<2x4x256xf32, #tpu.memory_space<vmem>>, vector<1x4x256xf32>
    %15 = vector.shape_cast %14 : vector<1x4x256xf32> to vector<4x256xf32>
    %16 = vector.broadcast %0 : vector<4x1xf32> to vector<4x256xf32>
    %17 = arith.subf %15, %16 : vector<4x256xf32>
    %cst_9 = arith.constant dense<0.000000e+00> : vector<4xf32>
    %18 = vector.multi_reduction <add>, %17, %cst_9 [1] : vector<4x256xf32> to vector<4xf32>
    %19 = vector.shape_cast %18 : vector<4xf32> to vector<4x1xf32>
    %20 = arith.addf %9, %19 : vector<4x1xf32>
    %21 = arith.mulf %17, %17 : vector<4x256xf32>
    %cst_10 = arith.constant dense<0.000000e+00> : vector<4xf32>
    %22 = vector.multi_reduction <add>, %21, %cst_10 [1] : vector<4x256xf32> to vector<4xf32>
    %23 = vector.shape_cast %22 : vector<4xf32> to vector<4x1xf32>
    %24 = arith.addf %13, %23 : vector<4x1xf32>
    %cst_11 = arith.constant 0.001953125 : f32
    %25 = vector.broadcast %cst_11 : f32 to vector<4x1xf32>
    %26 = arith.mulf %20, %25 : vector<4x1xf32>
    %cst_12 = arith.constant 0.001953125 : f32
    %27 = vector.broadcast %cst_12 : f32 to vector<4x1xf32>
    %28 = arith.mulf %24, %27 : vector<4x1xf32>
    %29 = arith.mulf %26, %26 : vector<4x1xf32>
    %30 = arith.subf %28, %29 : vector<4x1xf32>
    %cst_13 = arith.constant 0.000000e+00 : f32
    %31 = vector.broadcast %cst_13 : f32 to vector<4x1xf32>
    %32 = arith.maximumf %30, %31 : vector<4x1xf32>
    %33 = arith.addf %0, %26 : vector<4x1xf32>
    %c0_14 = arith.constant 0 : index
    %c0_15 = arith.constant 0 : index
    %34 = vector.load %arg1[%c0_14, %c0_15] : memref<4x1xf32, #tpu.memory_space<vmem>>, vector<4x1xf32>
    %cst_16 = arith.constant 9.99999974E-6 : f32
    %35 = vector.broadcast %cst_16 : f32 to vector<4x1xf32>
    %36 = arith.addf %32, %35 : vector<4x1xf32>
    %37 = math.rsqrt %36 : vector<4x1xf32>
    %38 = arith.mulf %34, %37 : vector<4x1xf32>
    %c0_17 = arith.constant 0 : index
    %c0_18 = arith.constant 0 : index
    %39 = vector.load %arg2[%c0_17, %c0_18] : memref<4x1xf32, #tpu.memory_space<vmem>>, vector<4x1xf32>
    %40 = arith.mulf %33, %38 : vector<4x1xf32>
    %41 = arith.subf %39, %40 : vector<4x1xf32>
    %c0_19 = arith.constant 0 : index
    %c0_20 = arith.constant 0 : index
    %c0_21 = arith.constant 0 : index
    %42 = vector.load %arg4[%c0_19, %c0_20, %c0_21] : memref<2x4x256xf32, #tpu.memory_space<vmem>>, vector<1x4x256xf32>
    %43 = vector.shape_cast %42 : vector<1x4x256xf32> to vector<4x256xf32>
    %44 = vector.broadcast %38 : vector<4x1xf32> to vector<4x256xf32>
    %45 = arith.mulf %43, %44 : vector<4x256xf32>
    %46 = vector.broadcast %41 : vector<4x1xf32> to vector<4x256xf32>
    %47 = arith.addf %45, %46 : vector<4x256xf32>
    %c0_22 = arith.constant 0 : index
    %c0_23 = arith.constant 0 : index
    %c0_24 = arith.constant 0 : index
    %48 = vector.load %arg5[%c0_22, %c0_23, %c0_24] : memref<2x4x256xf32, #tpu.memory_space<vmem>>, vector<1x4x256xf32>
    %49 = vector.shape_cast %48 : vector<1x4x256xf32> to vector<4x256xf32>
    %50 = vector.shape_cast %47 : vector<4x256xf32> to vector<1x4x256xf32>
    tpu.vector_store %arg5[%c0_22, %c0_23, %c0_24], %50 {strides = array<i32>} : memref<2x4x256xf32, #tpu.memory_space<vmem>>, vector<1x4x256xf32>,
    %c1_25 = arith.constant 1 : index
    %c0_26 = arith.constant 0 : index
    %c0_27 = arith.constant 0 : index
    %51 = vector.load %arg4[%c1_25, %c0_26, %c0_27] : memref<2x4x256xf32, #tpu.memory_space<vmem>>, vector<1x4x256xf32>
    %52 = vector.shape_cast %51 : vector<1x4x256xf32> to vector<4x256xf32>
    %53 = vector.broadcast %38 : vector<4x1xf32> to vector<4x256xf32>
    %54 = arith.mulf %52, %53 : vector<4x256xf32>
    %55 = vector.broadcast %41 : vector<4x1xf32> to vector<4x256xf32>
    %56 = arith.addf %54, %55 : vector<4x256xf32>
    %c1_28 = arith.constant 1 : index
    %c0_29 = arith.constant 0 : index
    %c0_30 = arith.constant 0 : index
    %57 = vector.load %arg5[%c1_28, %c0_29, %c0_30] : memref<2x4x256xf32, #tpu.memory_space<vmem>>, vector<1x4x256xf32>
    %58 = vector.shape_cast %57 : vector<1x4x256xf32> to vector<4x256xf32>
    %59 = vector.shape_cast %56 : vector<4x256xf32> to vector<1x4x256xf32>
    tpu.vector_store %arg5[%c1_28, %c0_29, %c0_30], %59 {strides = array<i32>} : memref<2x4x256xf32, #tpu.memory_space<vmem>>, vector<1x4x256xf32>,
    %c0_31 = arith.constant 0 : index
    %c0_32 = arith.constant 0 : index
    %60 = vector.load %arg6[%c0_31, %c0_32] : memref<4x1xf32, #tpu.memory_space<vmem>>, vector<4x1xf32>
    tpu.vector_store %arg6[%c0_31, %c0_32], %33 {strides = array<i32>} : memref<4x1xf32, #tpu.memory_space<vmem>>, vector<4x1xf32>,
    %c0_33 = arith.constant 0 : index
    %c0_34 = arith.constant 0 : index
    %61 = vector.load %arg7[%c0_33, %c0_34] : memref<4x1xf32, #tpu.memory_space<vmem>>, vector<4x1xf32>
    tpu.vector_store %arg7[%c0_33, %c0_34], %32 {strides = array<i32>} : memref<4x1xf32, #tpu.memory_space<vmem>>, vector<4x1xf32>,
    return
  }
  func.func @transform_0(%arg0: i32) -> (i32, i32) {
    %c0_i32 = arith.constant 0 : i32
    %c0_i32_0 = arith.constant 0 : i32
    %c0_i32_1 = arith.constant 0 : i32
    return %c0_i32, %c0_i32_0 : i32, i32
  }
  func.func @transform_1(%arg0: i32) -> (i32, i32) {
    %c0_i32 = arith.constant 0 : i32
    %c0_i32_0 = arith.constant 0 : i32
    %c0_i32_1 = arith.constant 0 : i32
    return %c0_i32, %c0_i32_0 : i32, i32
  }
  func.func @transform_2(%arg0: i32) -> (i32, i32) {
    %c0_i32 = arith.constant 0 : i32
    %c0_i32_0 = arith.constant 0 : i32
    %c0_i32_1 = arith.constant 0 : i32
    return %c0_i32, %c0_i32_0 : i32, i32
  }
  func.func @transform_3(%arg0: i32) -> (i32, i32, i32) {
    %c0_i32 = arith.constant 0 : i32
    %c0_i32_0 = arith.constant 0 : i32
    %c0_i32_1 = arith.constant 0 : i32
    %c0_i32_2 = arith.constant 0 : i32
    return %c0_i32, %c0_i32_0, %c0_i32_1 : i32, i32, i32
  }
  func.func @transform_4(%arg0: i32) -> (i32, i32, i32) {
    %c0_i32 = arith.constant 0 : i32
    %c0_i32_0 = arith.constant 0 : i32
    %c0_i32_1 = arith.constant 0 : i32
    %c0_i32_2 = arith.constant 0 : i32
    return %c0_i32, %c0_i32_0, %c0_i32_1 : i32, i32, i32
  }
  func.func @transform_5(%arg0: i32) -> (i32, i32) {
    %c0_i32 = arith.constant 0 : i32
    %c0_i32_0 = arith.constant 0 : i32
    %c0_i32_1 = arith.constant 0 : i32
    return %c0_i32, %c0_i32_0 : i32, i32
  }
  func.func @transform_6(%arg0: i32) -> (i32, i32) {
    %c0_i32 = arith.constant 0 : i32
    %c0_i32_0 = arith.constant 0 : i32
    %c0_i32_1 = arith.constant 0 : i32
    return %c0_i32, %c0_i32_0 : i32, i32
  }
}

</mosaic_0001>

<llo_original>
// kernel: tpu_custom_call.1
$region0: #{tpu_custom_call.1}
  #allocation0 [shape = 'u32[]', space=smem, size = 0x4, offset = 0x4, fixed_abs, tag = 'smem constant byte address 0x4 - core index']
  #allocation1 [shape = 'u32[144,128]{1,0:T(1,128)}', space=vmem, size = 0x12000, scoped, tag = 'internal scratch']
  %s0 = inlined_call_operand.vmem [shape: f32[4,1], index: 0, kind: input, shape index: {}]
  %s1 = inlined_call_operand.vmem [shape: f32[4,1], index: 1, kind: input, shape index: {}]
  %s2 = inlined_call_operand.vmem [shape: f32[4,1], index: 2, kind: input, shape index: {}]
  %s3 = inlined_call_operand.vmem [shape: f32[2,4,256], index: 3, kind: input, shape index: {}]
  %s4 = inlined_call_operand.hbm [shape: f32[2,4,256], index: 4, kind: output, shape index: {0}]
  %s5 = inlined_call_operand.vmem [shape: f32[4,1], index: 5, kind: output, shape index: {1}]
  %s6 = inlined_call_operand.vmem [shape: f32[4,1], index: 6, kind: output, shape index: {2}]
  %7 = xla_tuple %s4, %s5, %s6
  %s8 = sld [smem:[#allocation0]]
  $region42: #{tpu_custom_call.1} parent=0
    _
  %s10 = ssub.s32 1, %s8
  %s11 = scalar_select 0, %s10, %s8
  $region1: #{tpu_custom_call.1} parent=0
    #allocation2 [shape = 'u8[8192]{0}', space=vmem, size = 0x2000, scoped, tag = 'output window, operand 0, single buffered']
    #allocation3 [shape = 's32[1]{0}', space=sflag, size = 0x4, scoped, tag = 'scoped memory for tpu_custom_call.1']
    %12 = vsyncpa [#allocation3], 0
    // Predicated region
    $region2: #{tpu_custom_call.1} parent=1 // pred_check
      _
    $region3: #{tpu_custom_call.1} parent=1 // pred_check_branch
      %14 = sbr.rel (0) target = $region5
    $region4: #{tpu_custom_call.1} parent=1 // pred_region
      _
    $region5: #{tpu_custom_call.1} parent=1 // pred_fallthru
      _
    // Predicated region
    $region6: #{tpu_custom_call.1} parent=1 // pred_check
      _
    $region7: #{tpu_custom_call.1} parent=1 // pred_check_branch
      %16 = sbr.rel (0) target = $region9
    $region8: #{tpu_custom_call.1} parent=1 // pred_region
      _
    $region9: #{tpu_custom_call.1} parent=1 // pred_fallthru
      _
    // Predicated region
    $region10: #{tpu_custom_call.1} parent=1 // pred_check
      _
    $region11: #{tpu_custom_call.1} parent=1 // pred_check_branch
      %18 = sbr.rel (0) target = $region13
    $region12: #{tpu_custom_call.1} parent=1 // pred_region
      _
    $region13: #{tpu_custom_call.1} parent=1 // pred_fallthru
      _
    // Predicated region
    $region14: #{tpu_custom_call.1} parent=1 // pred_check
      _
    $region15: #{tpu_custom_call.1} parent=1 // pred_check_branch
      %20 = sbr.rel (0) target = $region17
    $region16: #{tpu_custom_call.1} parent=1 // pred_region
      _
    $region17: #{tpu_custom_call.1} parent=1 // pred_fallthru
      _
    %v21 = vld [vmem:[%s2] sm:$0xf]
    %v22 = vld [vmem:[%s3] sm:$0xff]
    %24 = vset.pattern.permute.xlu0 0
    %25 = vperm.xlu0 %24, %v21
    %v26 = vpop.permute.xlu0 %25
    %v28 = vunpack.c.l.s4 839922192
    %v29 = vunpack.c.0.s8 %v28
    %v30 = vlaneseq
    %v31 = vshrl.u32 %v30, 7
    %v32 = vsub.s32 %v29, %v31
    %v33 = vrot.slane %v26, %v32
    %v35 = vsub.f32 %v22, %v33
    %v37 = vcombine.high %v35, %v35
    %vm39 = vcmask 1043456
    %v40 = vsel %vm39, %v35, 0.0
    %v41 = vsel %vm39, %v37, 0.0
    %v42 = vadd.f32 %v40, %v41
    %43 = vadd.xlane.f32.xlu0 %v42
    %v44 = vpop.xlane.xlu0 %43
    %v45 = vadd.f32 %v44, 0.0
    %v46 = vmul.f32 %v35, %v35
    %v48 = vcombine.high %v46, %v46
    %v50 = vsel %vm39, %v46, 0.0
    %v51 = vsel %vm39, %v48, 0.0
    %v52 = vadd.f32 %v50, %v51
    %53 = vadd.xlane.f32.xlu0 %v52
    %v54 = vpop.xlane.xlu0 %53
    %v55 = vadd.f32 %v54, 0.0
    %s56 = scalar_lea.vmem %s3, 8
    %v57 = vld [vmem:[%s56] sm:$0xff]
    %v58 = vsub.f32 %v57, %v33
    %v60 = vcombine.high %v58, %v58
    %v62 = vsel %vm39, %v58, 0.0
    %v63 = vsel %vm39, %v60, 0.0
    %v64 = vadd.f32 %v62, %v63
    %65 = vadd.xlane.f32.xlu0 %v64
    %v66 = vpop.xlane.xlu0 %65
    %v67 = vadd.f32 %v45, %v66
    %v68 = vmul.f32 %v58, %v58
    %v70 = vcombine.high %v68, %v68
    %v72 = vsel %vm39, %v68, 0.0
    %v73 = vsel %vm39, %v70, 0.0
    %v74 = vadd.f32 %v72, %v73
    %75 = vadd.xlane.f32.xlu0 %v74
    %v76 = vpop.xlane.xlu0 %75
    %v77 = vadd.f32 %v55, %v76
    %v78 = vmul.f32 %v67, 0.001953125
    %v79 = vmul.f32 %v77, 0.001953125
    %v80 = vmul.f32 %v78, %v78
    %v81 = vsub.f32 %v79, %v80
    %v82 = vmax.f32 %v81, 0.0
    %v83 = vadd.f32 %v21, %v78
    %v84 = vld [vmem:[%s0] sm:$0xf]
    %v85 = vadd.f32 %v82, 1e-05
    %v86 = vrsqrt.pop %v85
    %v87 = vmul.f32 %v84, %v86
    %v88 = vld [vmem:[%s1] sm:$0xf]
    %v89 = vmul.f32 %v83, %v87
    %v90 = vsub.f32 %v88, %v89
    %92 = vset.pattern.permute.xlu0 0
    %93 = vperm.xlu0 %92, %v87
    %v94 = vpop.permute.xlu0 %93
    %v96 = vunpack.c.l.s4 839922192
    %v97 = vunpack.c.0.s8 %v96
    %v98 = vlaneseq
    %v99 = vshrl.u32 %v98, 7
    %v100 = vsub.s32 %v97, %v99
    %v101 = vrot.slane %v94, %v100
    %v103 = vmul.f32 %v22, %v101
    %105 = vset.pattern.permute.xlu0 0
    %106 = vperm.xlu0 %105, %v90
    %v107 = vpop.permute.xlu0 %106
    %v109 = vunpack.c.l.s4 839922192
    %v110 = vunpack.c.0.s8 %v109
    %v111 = vlaneseq
    %v112 = vshrl.u32 %v111, 7
    %v113 = vsub.s32 %v110, %v112
    %v114 = vrot.slane %v107, %v113
    %v116 = vadd.f32 %v103, %v114
    %117 = vst [vmem:[#allocation2] sm:$0xff] %v116
    %v118 = vld [vmem:[%s56] sm:$0xff]
    %v119 = vmul.f32 %v118, %v101
    %v120 = vadd.f32 %v119, %v114
    %s121 = scalar_lea.vmem [#allocation2], 8
    %122 = vst [vmem:[%s121] sm:$0xff] %v120
    %vm123 = vcmask 3072
    %124 = vst.msk [vmem:[%s5] sm:$0xf] %vm123, %v83
    %125 = vst.msk [vmem:[%s6] sm:$0xf] %vm123, %v82
    // Predicated region
    $region18: #{tpu_custom_call.1} parent=1 // pred_check
      _
    $region19: #{tpu_custom_call.1} parent=1 // pred_check_branch
      %127 = sbr.rel (0) target = $region21
    $region20: #{tpu_custom_call.1} parent=1 // pred_region
      %s129 = ssub.s32 256, 256
      %130 = vsyncadd [#allocation3], %s129
      %s131 = sshll.u32 [#allocation2], 4
      %s132 = int_to_ptr.vmem [resolvable:$true] %s131
      %137 = dma.vmem_to_hbm [thread:$0]  %s132, 256, %s4, [#allocation3], 128, 128, 8
    $region21: #{tpu_custom_call.1} parent=1 // pred_fallthru
      _
    // Predicated region
    $region22: #{tpu_custom_call.1} parent=1 // pred_check
      _
    $region23: #{tpu_custom_call.1} parent=1 // pred_check_branch
      %139 = sbr.rel (0) target = $region25
    $region24: #{tpu_custom_call.1} parent=1 // pred_region
      _
    $region25: #{tpu_custom_call.1} parent=1 // pred_fallthru
      _
    // Predicated region
    $region26: #{tpu_custom_call.1} parent=1 // pred_check
      _
    $region27: #{tpu_custom_call.1} parent=1 // pred_check_branch
      %141 = sbr.rel (0) target = $region29
    $region28: #{tpu_custom_call.1} parent=1 // pred_region
      _
    $region29: #{tpu_custom_call.1} parent=1 // pred_fallthru
      _
    // Predicated region
    $region30: #{tpu_custom_call.1} parent=1 // pred_check
      _
    $region31: #{tpu_custom_call.1} parent=1 // pred_check_branch
      %143 = sbr.rel (0) target = $region33
    $region32: #{tpu_custom_call.1} parent=1 // pred_region
      %144 = dma.done [#allocation3], 256
    $region33: #{tpu_custom_call.1} parent=1 // pred_fallthru
      _
    // Predicated region
    $region34: #{tpu_custom_call.1} parent=1 // pred_check
      _
    $region35: #{tpu_custom_call.1} parent=1 // pred_check_branch
      %146 = sbr.rel (0) target = $region37
    $region36: #{tpu_custom_call.1} parent=1 // pred_region
      _
    $region37: #{tpu_custom_call.1} parent=1 // pred_fallthru
      _
    // Predicated region
    $region38: #{tpu_custom_call.1} parent=1 // pred_check
      _
    $region39: #{tpu_custom_call.1} parent=1 // pred_check_branch
      %148 = sbr.rel (0) target = $region41
    $region40: #{tpu_custom_call.1} parent=1 // pred_region
      _
    $region41: #{tpu_custom_call.1} parent=1 // pred_fallthru
      _
    %149 = vsyncpa [#allocation3], 1

</llo_original>
